<compile_context>
chip_gen: v5e
topology: v5e:2x2
jax: 0.10.0
libtpu: 0.0.40
codegen_flags: <defaults>
</compile_context>

<pallas_src>
import functools

import jax
import jax.numpy as jnp
from jax.experimental import pallas as pl
from jax.experimental.pallas import tpu as pltpu


def _round_up(x, m):
    return (x + m - 1) // m * m


def _choose_tiles(M, N, K, dtype_bytes=4, vmem_budget=24 * 1024 * 1024):
    """Pick (tm, tn): large, MXU/lane aligned, under a conservative VMEM budget."""
    tm = min(256, _round_up(M, 8))
    tn = min(512, _round_up(N, 128))

    def footprint(tm_, tn_):
        x_b = tm_ * K * dtype_bytes
        w_b = K * 2 * tn_ * dtype_bytes
        b_b = 2 * tn_ * dtype_bytes
        o_b = tm_ * tn_ * dtype_bytes
        return 2 * (x_b + w_b + b_b + o_b)  # double-buffered pipeline

    while footprint(tm, tn) > vmem_budget and tn > 128:
        tn = max(128, (tn // 2) // 128 * 128)
    while footprint(tm, tn) > vmem_budget and tm > 8:
        tm = max(8, (tm // 2) // 8 * 8)
    # TODO(synk): for extremely large K where even a (K, 2*128) weight tile does
    # not fit VMEM, fall back to a K-tiled reduction grid with an f32 accumulator.
    return tm, tn


def pack_maxout_params(w1, b1, w2, b2, tn):
    """Pack nn.Linear-layout weights into one per-tile-interleaved matrix.

    Call ONCE at model-load time (not inside the per-call hot path).
      w1, w2 : (N, K)  PyTorch nn.Linear weight layout
      b1, b2 : (N,)
    Returns:
      w_packed : (K, 2*Np) with columns [tile_j W1 cols | tile_j W2 cols] per tile
      b_packed : (1, 2*Np) matching layout
    """
    N, K = w1.shape
    Np = _round_up(N, tn)
    pad_n = Np - N
    w1t = jnp.pad(w1, ((0, pad_n), (0, 0))).T.astype(jnp.float32)  # (K, Np)
    w2t = jnp.pad(w2, ((0, pad_n), (0, 0))).T.astype(jnp.float32)  # (K, Np)
    b1p = jnp.pad(b1, (0, pad_n)).astype(jnp.float32)
    b2p = jnp.pad(b2, (0, pad_n)).astype(jnp.float32)
    nt = Np // tn
    w_packed = jnp.stack(
        [w1t.reshape(K, nt, tn), w2t.reshape(K, nt, tn)], axis=2
    ).reshape(K, 2 * Np)
    b_packed = jnp.stack(
        [b1p.reshape(nt, tn), b2p.reshape(nt, tn)], axis=1
    ).reshape(1, 2 * Np)
    return w_packed, b_packed


def _maxout_kernel(x_ref, w_ref, b_ref, o_ref):
    # Single fused MXU matmul per grid step: (tm, K) @ (K, 2*tn) -> (tm, 2*tn) f32.
    acc = jnp.dot(x_ref[...], w_ref[...], preferred_element_type=jnp.float32)
    acc = acc + b_ref[...]                     # biases folded into the epilogue
    tn = o_ref.shape[-1]
    y1 = acc[:, :tn]                           # linear1 half of this output tile
    y2 = acc[:, tn:]                           # linear2 half of this output tile
    o_ref[...] = jnp.maximum(y1, y2).astype(o_ref.dtype)


@functools.partial(jax.jit, static_argnames=("n_out", "tm", "tn"))
def maxout_linear_packed(x, w_packed, b_packed, *, n_out, tm, tn):
    """y = max(linear1(x), linear2(x)) given pre-packed weights.

    x        : (..., K)
    w_packed : (K, 2*Np)  from pack_maxout_params (same tn!)
    b_packed : (1, 2*Np)
    returns  : (..., n_out)
    """
    *lead, K = x.shape
    M = 1
    for d in lead:
        M *= d
    x2 = x.reshape(M, K).astype(jnp.float32)

    twoNp = w_packed.shape[1]
    assert twoNp % (2 * tn) == 0, "w_packed must be packed with the same tn"
    Np = twoNp // 2

    Mp = _round_up(M, tm)
    if Mp != M:
        x2 = jnp.pad(x2, ((0, Mp - M), (0, 0)))

    grid = (Np // tn, Mp // tm)  # (n-tiles outer, m-tiles inner): weights resident

    cost = pl.CostEstimate(
        flops=2 * Mp * twoNp * K,
        transcendentals=0,
        bytes_accessed=4 * (Mp * K + K * twoNp + twoNp + Mp * Np),
    )

    out = pl.pallas_call(
        _maxout_kernel,
        out_shape=jax.ShapeDtypeStruct((Mp, Np), x.dtype),
        grid=grid,
        in_specs=[
            pl.BlockSpec((tm, K), lambda j, i: (i, 0)),      # x: streams over i
            pl.BlockSpec((K, 2 * tn), lambda j, i: (0, j)),  # weights: resident across i
            pl.BlockSpec((1, 2 * tn), lambda j, i: (0, j)),  # bias
        ],
        out_specs=pl.BlockSpec((tm, tn), lambda j, i: (i, j)),
        compiler_params=pltpu.CompilerParams(
            dimension_semantics=("parallel", "parallel"),
            vmem_limit_bytes=48 * 1024 * 1024,
        ),
        cost_estimate=cost,
    )(x2, w_packed, b_packed)

    return out[:M, :n_out].reshape(*lead, n_out)


def _init_linear_params(key, in_features, out_features):
    # Deterministic init mimicking nn.Linear's uniform(-1/sqrt(in), 1/sqrt(in)).
    kw, kb = jax.random.split(key)
    bound = 1.0 / jnp.sqrt(jnp.float32(in_features))
    w = jax.random.uniform(kw, (out_features, in_features), jnp.float32, -bound, bound)
    b = jax.random.uniform(kb, (out_features,), jnp.float32, -bound, bound)
    return w, b


if __name__ == "__main__":
    key = jax.random.PRNGKey(0)
    k_x, k_l1, k_l2 = jax.random.split(key, 3)

    batch, seq, in_features, out_features = 2, 8, 32, 128

    x = jax.random.normal(k_x, (batch, seq, in_features), jnp.float32)
    w1, b1 = _init_linear_params(k_l1, in_features, out_features)
    w2, b2 = _init_linear_params(k_l2, in_features, out_features)

    # Tile choice + one-time weight packing happen OUTSIDE the per-call hot path.
    tm, tn = _choose_tiles(batch * seq, out_features, in_features)
    w_packed, b_packed = jax.block_until_ready(
        pack_maxout_params(w1, b1, w2, b2, tn)
    )

    y = maxout_linear_packed(
        x, w_packed, b_packed, n_out=out_features, tm=tm, tn=tn
    )
    y = jax.block_until_ready(y)

    # Reference check in plain JAX.
    ref = jnp.maximum(x @ w1.T + b1, x @ w2.T + b2)
    assert y.shape == (batch, seq, out_features)
    assert jnp.allclose(y, ref, atol=1e-5, rtol=1e-5)

    print("KERNEL_OK")
</pallas_src>

<mosaic_0001>
module attributes {stable_mosaic.version = 11 : i64} {
  func.func @_maxout_kernel(%arg0: i32, %arg1: i32, %arg2: memref<16x32xf32, #tpu.memory_space<vmem>>, %arg3: memref<32x256xf32, #tpu.memory_space<vmem>>, %arg4: memref<1x256xf32, #tpu.memory_space<vmem>>, %arg5: memref<16x128xf32, #tpu.memory_space<vmem>>) attributes {dimension_semantics = [#tpu.dimension_semantics<parallel>, #tpu.dimension_semantics<parallel>], iteration_bounds = array<i64: 1, 1>, scalar_prefetch = 0 : i64, scratch_operands = 0 : i64, tpu.core_type = #tpu.core_type<tc>, window_params = [{transform_indices = @transform_0, window_bounds = array<i64: 16, 32>}, {transform_indices = @transform_1, window_bounds = array<i64: 32, 256>}, {transform_indices = @transform_2, window_bounds = array<i64: 1, 256>}, {transform_indices = @transform_3, window_bounds = array<i64: 16, 128>}]} {
    %c0 = arith.constant 0 : index
    %c0_0 = arith.constant 0 : index
    %0 = vector.load %arg2[%c0, %c0_0] : memref<16x32xf32, #tpu.memory_space<vmem>>, vector<16x32xf32>
    %c0_1 = arith.constant 0 : index
    %c0_2 = arith.constant 0 : index
    %1 = vector.load %arg3[%c0_1, %c0_2] : memref<32x256xf32, #tpu.memory_space<vmem>>, vector<32x256xf32>
    %cst = arith.constant dense<0.000000e+00> : vector<16x256xf32>
    %2 = tpu.matmul %0, %1, %cst {dimension_numbers = #tpu.dot_dimension_numbers<[1], [0], [0], [1], [0, 0, 1, 1], [], []>} : vector<16x32xf32>, vector<32x256xf32>, vector<16x256xf32> -> vector<16x256xf32>
    %c0_3 = arith.constant 0 : index
    %c0_4 = arith.constant 0 : index
    %3 = vector.load %arg4[%c0_3, %c0_4] : memref<1x256xf32, #tpu.memory_space<vmem>>, vector<1x256xf32>
    %4 = vector.broadcast %3 : vector<1x256xf32> to vector<16x256xf32>
    %5 = arith.addf %2, %4 : vector<16x256xf32>
    %6 = vector.extract_strided_slice %5 {offsets = [0, 0], sizes = [16, 128], strides = [1, 1]} : vector<16x256xf32> to vector<16x128xf32>
    %7 = vector.extract_strided_slice %5 {offsets = [0, 128], sizes = [16, 128], strides = [1, 1]} : vector<16x256xf32> to vector<16x128xf32>
    %8 = arith.maximumf %6, %7 : vector<16x128xf32>
    %c0_5 = arith.constant 0 : index
    %c0_6 = arith.constant 0 : index
    %9 = vector.load %arg5[%c0_5, %c0_6] : memref<16x128xf32, #tpu.memory_space<vmem>>, vector<16x128xf32>
    tpu.vector_store %arg5[%c0_5, %c0_6], %8 {strides = array<i32>} : memref<16x128xf32, #tpu.memory_space<vmem>>, vector<16x128xf32>,
    return
  }
  func.func @transform_0(%arg0: i32, %arg1: i32) -> (i32, i32) {
    %c0_i32 = arith.constant 0 : i32
    %c0_i32_0 = arith.constant 0 : i32
    return %arg1, %c0_i32 : i32, i32
  }
  func.func @transform_1(%arg0: i32, %arg1: i32) -> (i32, i32) {
    %c0_i32 = arith.constant 0 : i32
    %c0_i32_0 = arith.constant 0 : i32
    return %c0_i32, %arg0 : i32, i32
  }
  func.func @transform_2(%arg0: i32, %arg1: i32) -> (i32, i32) {
    %c0_i32 = arith.constant 0 : i32
    %c0_i32_0 = arith.constant 0 : i32
    return %c0_i32, %arg0 : i32, i32
  }
  func.func @transform_3(%arg0: i32, %arg1: i32) -> (i32, i32) {
    %c0_i32 = arith.constant 0 : i32
    return %arg1, %arg0 : i32, i32
  }
}

</mosaic_0001>

<llo_original>
// kernel: maxout_linear_packed.1
$region0: #{maxout_linear_packed.1}
  #allocation0 [shape = 'u32[]', space=smem, size = 0x4, offset = 0x4, fixed_abs, tag = 'smem constant byte address 0x4 - core index']
  #allocation1 [shape = 'u32[72,128]{1,0:T(1,128)}', space=vmem, size = 0x9000, scoped, tag = 'internal scratch']
  %s0 = inlined_call_operand.hbm [shape: f32[16,32], index: 0, kind: input, shape index: {}]
  %s1 = inlined_call_operand.hbm [shape: f32[32,256], index: 1, kind: input, shape index: {}]
  %s2 = inlined_call_operand.vmem [shape: f32[1,256], index: 2, kind: input, shape index: {}]
  %s3 = inlined_call_operand.hbm [shape: f32[16,128], index: 3, kind: output, shape index: {}]
  %s4 = sld [smem:[#allocation0]]
  $region30: #{maxout_linear_packed.1} parent=0
    _
  %s6 = ssub.s32 1, %s4
  %s7 = scalar_select 0, %s6, %s4
  $region1: #{maxout_linear_packed.1} parent=0
    #allocation2 [shape = 'u8[8192]{0}', space=vmem, size = 0x2000, scoped, tag = 'input window, operand 0, single buffered']
    #allocation3 [shape = 's32[1]{0}', space=sflag, size = 0x4, scoped, tag = 'scoped memory for maxout_linear_packed.1']
    #allocation4 [shape = 's32[1]{0}', space=sflag, size = 0x4, scoped, tag = 'scoped memory for maxout_linear_packed.1']
    #allocation5 [shape = 'u8[32768]{0}', space=vmem, size = 0x8000, scoped, tag = 'input window, operand 1, single buffered']
    #allocation6 [shape = 's32[1]{0}', space=sflag, size = 0x4, scoped, tag = 'scoped memory for maxout_linear_packed.1']
    #allocation7 [shape = 'u8[8192]{0}', space=vmem, size = 0x2000, scoped, tag = 'output window, operand 0, single buffered']
    %8 = vsyncpa [#allocation3], 0
    %9 = vsyncpa [#allocation6], 0
    %10 = vsyncpa [#allocation4], 0
    // Predicated region
    $region2: #{maxout_linear_packed.1} parent=1 // pred_check
      _
    $region3: #{maxout_linear_packed.1} parent=1 // pred_check_branch
      %12 = sbr.rel (0) target = $region5
    $region4: #{maxout_linear_packed.1} parent=1 // pred_region
      %14 = vsyncadd [#allocation3], 0
      %s15 = sshll.u32 %s0, 4
      %s16 = int_to_ptr.hbm [resolvable:$true] %s15
      %s17 = sshll.u32 [#allocation2], 4
      %s18 = int_to_ptr.vmem [resolvable:$true] %s17
      %23 = dma.hbm_to_vmem [thread:$0]  %s16, 256, %s18, [#allocation3], 128, 128, 8
    $region5: #{maxout_linear_packed.1} parent=1 // pred_fallthru
      _
    // Predicated region
    $region6: #{maxout_linear_packed.1} parent=1 // pred_check
      _
    $region7: #{maxout_linear_packed.1} parent=1 // pred_check_branch
      %25 = sbr.rel (0) target = $region9
    $region8: #{maxout_linear_packed.1} parent=1 // pred_region
      %27 = vsyncadd [#allocation6], 0
      %s28 = sshll.u32 %s1, 4
      %s29 = int_to_ptr.hbm [resolvable:$true] %s28
      %s30 = sshll.u32 [#allocation5], 4
      %s31 = int_to_ptr.vmem [resolvable:$true] %s30
      %36 = dma.hbm_to_vmem [thread:$0]  %s29, 1024, %s31, [#allocation6], 256, 256, 16
    $region9: #{maxout_linear_packed.1} parent=1 // pred_fallthru
      _
    // Predicated region
    $region10: #{maxout_linear_packed.1} parent=1 // pred_check
      _
    $region11: #{maxout_linear_packed.1} parent=1 // pred_check_branch
      %38 = sbr.rel (0) target = $region13
    $region12: #{maxout_linear_packed.1} parent=1 // pred_region
      _
    $region13: #{maxout_linear_packed.1} parent=1 // pred_fallthru
      _
    // Predicated region
    $region14: #{maxout_linear_packed.1} parent=1 // pred_check
      _
    $region15: #{maxout_linear_packed.1} parent=1 // pred_check_branch
      %40 = sbr.rel (0) target = $region17
    $region16: #{maxout_linear_packed.1} parent=1 // pred_region
      %42 = dma.done [#allocation3], 256
    $region17: #{maxout_linear_packed.1} parent=1 // pred_fallthru
      _
    // Predicated region
    $region18: #{maxout_linear_packed.1} parent=1 // pred_check
      _
    $region19: #{maxout_linear_packed.1} parent=1 // pred_check_branch
      %44 = sbr.rel (0) target = $region21
    $region20: #{maxout_linear_packed.1} parent=1 // pred_region
      %46 = dma.done [#allocation6], 1024
    $region21: #{maxout_linear_packed.1} parent=1 // pred_fallthru
      _
    %v47 = vld [vmem:[#allocation2] sm:$0xff]
    %v48 = vld [vmem:[#allocation2 + $0x8] sm:$0xff]
    %v49 = vld [vmem:[#allocation5] sm:$0xff]
    %v50 = vld [vmem:[#allocation5 + $0x8] sm:$0xff]
    %v51 = vld [vmem:[#allocation5 + $0x10] sm:$0xff]
    %v52 = vld [vmem:[#allocation5 + $0x18] sm:$0xff]
    %v53 = vld [vmem:[#allocation5 + $0x20] sm:$0xff]
    %v54 = vld [vmem:[#allocation5 + $0x28] sm:$0xff]
    %v55 = vld [vmem:[#allocation5 + $0x30] sm:$0xff]
    %v56 = vld [vmem:[#allocation5 + $0x38] sm:$0xff]
    %v57 = vld [vmem:[%s2] sm:$0x3]
    %v59 = vperm.slane %v57, 0
    %v60 = vperm.slane %v57, 1
    %vm63 = vcmask 261120
    %v65 = vsel %vm63, %v47, 0
    %v68 = vsel %vm63, %v48, 0
    %70 = vmatpush.msra.mxu0 0.0
    %71 = vmatpush.msra.mxu0 0.0
    %72 = vmatpush.msra.mxu0 0.0
    %73 = vmatpush.msra.mxu0 0.0
    %74 = vmatpush.msra.mxu0 0.0
    %75 = vmatpush.msra.mxu0 0.0
    %76 = vmatpush.msra.mxu0 0.0
    %77 = vmatpush.msra.mxu0 0.0
    %78 = vmatpush.msra.mxu0 0.0
    %79 = vmatpush.msra.mxu0 0.0
    %80 = vmatpush.msra.mxu0 0.0
    %81 = vmatpush.msra.mxu0 0.0
    %82 = vmatpush.msra.mxu0 %v55
    %83 = vmatpush.msra.mxu0 %v53
    %84 = vmatpush.msra.mxu0 %v51
    %85 = vmatpush.msra.mxu0 %v49
    %86 = vmatmul.f32.gmra.mxu0 %v65
    %v87 = vpop.f32.mrf.mxu0
    %v88 = vadd.f32 %v59, %v87
    %89 = vmatmul.f32.gmra.mxu0 %v68
    %v90 = vpop.f32.mrf.mxu0
    %v91 = vadd.f32 %v59, %v90
    %92 = vdwg.mxu0
    %93 = vmatpush.msra.mxu0 0.0
    %94 = vmatpush.msra.mxu0 0.0
    %95 = vmatpush.msra.mxu0 0.0
    %96 = vmatpush.msra.mxu0 0.0
    %97 = vmatpush.msra.mxu0 0.0
    %98 = vmatpush.msra.mxu0 0.0
    %99 = vmatpush.msra.mxu0 0.0
    %100 = vmatpush.msra.mxu0 0.0
    %101 = vmatpush.msra.mxu0 0.0
    %102 = vmatpush.msra.mxu0 0.0
    %103 = vmatpush.msra.mxu0 0.0
    %104 = vmatpush.msra.mxu0 0.0
    %105 = vmatpush.msra.mxu0 %v56
    %106 = vmatpush.msra.mxu0 %v54
    %107 = vmatpush.msra.mxu0 %v52
    %108 = vmatpush.msra.mxu0 %v50
    %109 = vmatmul.f32.gmra.mxu0 %v65
    %v110 = vpop.f32.mrf.mxu0
    %v111 = vadd.f32 %v60, %v110
    %112 = vmatmul.f32.gmra.mxu0 %v68
    %v113 = vpop.f32.mrf.mxu0
    %v114 = vadd.f32 %v60, %v113
    %115 = vdwg.mxu0
    %v116 = vmax.f32 %v88, %v111
    %v117 = vmax.f32 %v91, %v114
    %118 = vst [vmem:[#allocation7] sm:$0xff] %v116
    %119 = vst [vmem:[#allocation7 + $0x8] sm:$0xff] %v117
    // Predicated region
    $region22: #{maxout_linear_packed.1} parent=1 // pred_check
      _
    $region23: #{maxout_linear_packed.1} parent=1 // pred_check_branch
      %121 = sbr.rel (0) target = $region25
    $region24: #{maxout_linear_packed.1} parent=1 // pred_region
      %123 = vsyncadd [#allocation4], 0
      %s124 = sshll.u32 [#allocation7], 4
      %s125 = int_to_ptr.vmem [resolvable:$true] %s124
      %s126 = sshll.u32 %s3, 4
      %s127 = int_to_ptr.hbm [resolvable:$true] %s126
      %132 = dma.vmem_to_hbm [thread:$0]  %s125, 256, %s127, [#allocation4], 128, 128, 8
    $region25: #{maxout_linear_packed.1} parent=1 // pred_fallthru
      _
    // Predicated region
    $region26: #{maxout_linear_packed.1} parent=1 // pred_check
      _
    $region27: #{maxout_linear_packed.1} parent=1 // pred_check_branch
      %134 = sbr.rel (0) target = $region29
    $region28: #{maxout_linear_packed.1} parent=1 // pred_region
      %136 = dma.done [#allocation4], 256
    $region29: #{maxout_linear_packed.1} parent=1 // pred_fallthru
      _
    %137 = vsyncpa [#allocation3], 1
    %138 = vsyncpa [#allocation6], 1
    %139 = vsyncpa [#allocation4], 1

</llo_original>
